<compile_context>
chip_gen: v5e
topology: v5e:2x2
jax: 0.10.0
libtpu: 0.0.40
codegen_flags: <defaults>
</compile_context>

<pallas_src>
import jax
import jax.numpy as jnp
from jax.experimental import pallas as pl
from jax.experimental.pallas import tpu as pltpu


_MAX_TB = 4096  # rows per grid step; worst-case ~14 MiB/step VMEM, fits every generation.


def _round_up(n, m):
    return ((n + m - 1) // m) * m


def _choose_tb(batch):
    """Pick the batch tile (rows per grid step) from the static batch size."""
    if batch <= 256:
        # One full-batch tile: block dims equal to the full array dims are always legal,
        # and a single grid step minimizes the ~0.35 us/step pipeline overhead.
        return batch
    # Aim for (a multiple of) two tiles so v7x's two TensorCores both get work on the
    # "parallel" axis; each tile a multiple of 128 rows for full MXU row streams.
    return min(_round_up(pl.cdiv(batch, 2), 128), _MAX_TB)


def _mlp_kernel(x_ref, w1_ref, b1_ref, w2_ref, b2_ref, w3_ref, b3_ref, o_ref):
    """Fused 3-layer MLP (Linear + ReLU, x3) for one batch tile."""
    x = x_ref[...]

    # fc1 + ReLU, fc2 + ReLU on the MXU with f32 accumulation.
    h1 = jnp.dot(x, w1_ref[...], preferred_element_type=jnp.float32) + b1_ref[...]
    h1 = jnp.maximum(h1, 0.0)
    h2 = jnp.dot(h1, w2_ref[...], preferred_element_type=jnp.float32) + b2_ref[...]
    h2 = jnp.maximum(h2, 0.0)

    # fc3 has a single output feature: VPU multiply + cross-lane (XLU) reduction instead
    # of an N=1 MXU matmul.  keepdims=True keeps the result as a (tb, 1) sublane-major
    # column that matches the output block layout exactly -- no lane relayout needed.
    y = jnp.sum(h2 * w3_ref[...], axis=-1, keepdims=True) + b3_ref[...]
    o_ref[...] = jnp.maximum(y, 0.0).astype(o_ref.dtype)


@jax.jit
def custom_model_forward(x, w1, b1, w2, b2, w3, b3):
    """x: (B, input_dim); w1/w2: (in, out); b1/b2: (1, out); w3: (n2, 1); b3: (1, 1)."""
    B, input_dim = x.shape
    n1 = w1.shape[1]
    n2 = w2.shape[1]

    tb = _choose_tb(B)
    num_tiles = pl.cdiv(B, tb)

    # fc3 weight as a broadcastable (1, n2) row for the in-kernel VPU reduction.
    w3_row = w3.reshape(1, n2)

    x_spec = pl.BlockSpec((tb, input_dim), lambda i: (i, 0))
    # Parameter specs: constant index_maps -> loaded once, not re-DMA'd across grid steps.
    w1_spec = pl.BlockSpec((input_dim, n1), lambda i: (0, 0))
    b1_spec = pl.BlockSpec((1, n1), lambda i: (0, 0))
    w2_spec = pl.BlockSpec((n1, n2), lambda i: (0, 0))
    b2_spec = pl.BlockSpec((1, n2), lambda i: (0, 0))
    w3_spec = pl.BlockSpec((1, n2), lambda i: (0, 0))
    b3_spec = pl.BlockSpec((1, 1), lambda i: (0, 0))
    o_spec = pl.BlockSpec((tb, 1), lambda i: (i, 0))

    return pl.pallas_call(
        _mlp_kernel,
        out_shape=jax.ShapeDtypeStruct((B, 1), x.dtype),
        grid=(num_tiles,),
        in_specs=[x_spec, w1_spec, b1_spec, w2_spec, b2_spec, w3_spec, b3_spec],
        out_specs=o_spec,
        compiler_params=pltpu.CompilerParams(
            # Batch tiles are independent -> shard the grid across v7x's two TensorCores.
            dimension_semantics=("parallel",),
            # Headroom above v5e's 16 MiB scoped default; well under v7x's 64 MiB physical.
            vmem_limit_bytes=32 * 1024 * 1024,
        ),
    )(x, w1, b1, w2, b2, w3_row, b3)


def init_params(key, input_dim, neurons1, neurons2):
    """He-normal weights (kaiming_normal_, relu), PyTorch-default uniform biases.

    Weights stored as (in, out) = transpose of PyTorch's (out, in).
    """
    ks = jax.random.split(key, 6)

    def he_normal(k, fan_in, fan_out):
        std = (2.0 / fan_in) ** 0.5
        return jax.random.normal(k, (fan_in, fan_out), dtype=jnp.float32) * std

    def bias_uniform(k, fan_in, fan_out):
        bound = 1.0 / (fan_in ** 0.5)
        return jax.random.uniform(k, (1, fan_out), dtype=jnp.float32,
                                  minval=-bound, maxval=bound)

    w1 = he_normal(ks[0], input_dim, neurons1)
    b1 = bias_uniform(ks[1], input_dim, neurons1)
    w2 = he_normal(ks[2], neurons1, neurons2)
    b2 = bias_uniform(ks[3], neurons1, neurons2)
    w3 = he_normal(ks[4], neurons2, 1)
    b3 = bias_uniform(ks[5], neurons2, 1)
    return w1, b1, w2, b2, w3, b3


def reference_forward(x, w1, b1, w2, b2, w3, b3):
    h = jnp.maximum(x @ w1 + b1, 0.0)
    h = jnp.maximum(h @ w2 + b2, 0.0)
    h = jnp.maximum(h @ w3 + b3, 0.0)
    return h


if __name__ == "__main__":
    input_dim, neurons1, neurons2 = 32, 64, 32

    key = jax.random.PRNGKey(0)
    kx, kp = jax.random.split(key)
    params = init_params(kp, input_dim, neurons1, neurons2)

    # batch=512 -> two 256-row tiles (parallel grid, one per v7x TensorCore);
    # batch=100 -> one full-batch tile (no padding, no OOB);
    # batch=600 -> two 384-row tiles, exercising the masked partial tail block.
    for batch in (512, 100, 600):
        xb = jax.random.normal(jax.random.fold_in(kx, batch), (batch, input_dim),
                               dtype=jnp.float32)
        out = jax.block_until_ready(custom_model_forward(xb, *params))
        ref = reference_forward(xb, *params)
        assert out.shape == (batch, 1), f"bad output shape for batch={batch}"
        assert jnp.allclose(out, ref, atol=1e-4, rtol=1e-4), \
            f"Pallas kernel mismatch vs reference for batch={batch}"

    print("KERNEL_OK")
</pallas_src>

<mosaic_0001>
module attributes {stable_mosaic.version = 11 : i64} {
  func.func @_mlp_kernel(%arg0: i32, %arg1: memref<256x32xf32, #tpu.memory_space<vmem>>, %arg2: memref<32x64xf32, #tpu.memory_space<vmem>>, %arg3: memref<1x64xf32, #tpu.memory_space<vmem>>, %arg4: memref<64x32xf32, #tpu.memory_space<vmem>>, %arg5: memref<1x32xf32, #tpu.memory_space<vmem>>, %arg6: memref<1x32xf32, #tpu.memory_space<vmem>>, %arg7: memref<1x1xf32, #tpu.memory_space<vmem>>, %arg8: memref<256x1xf32, #tpu.memory_space<vmem>>) attributes {dimension_semantics = [#tpu.dimension_semantics<parallel>], iteration_bounds = array<i64: 2>, scalar_prefetch = 0 : i64, scratch_operands = 0 : i64, tpu.core_type = #tpu.core_type<tc>, window_params = [{transform_indices = @transform_0, window_bounds = array<i64: 256, 32>}, {pipeline_mode = #tpu.pipeline_mode<synchronous>, transform_indices = @transform_1, window_bounds = array<i64: 32, 64>}, {pipeline_mode = #tpu.pipeline_mode<synchronous>, transform_indices = @transform_2, window_bounds = array<i64: 1, 64>}, {pipeline_mode = #tpu.pipeline_mode<synchronous>, transform_indices = @transform_3, window_bounds = array<i64: 64, 32>}, {pipeline_mode = #tpu.pipeline_mode<synchronous>, transform_indices = @transform_4, window_bounds = array<i64: 1, 32>}, {pipeline_mode = #tpu.pipeline_mode<synchronous>, transform_indices = @transform_5, window_bounds = array<i64: 1, 32>}, {pipeline_mode = #tpu.pipeline_mode<synchronous>, transform_indices = @transform_6, window_bounds = array<i64: 1, 1>}, {transform_indices = @transform_7, window_bounds = array<i64: 256, 1>}]} {
    %c0 = arith.constant 0 : index
    %c0_0 = arith.constant 0 : index
    %0 = vector.load %arg1[%c0, %c0_0] : memref<256x32xf32, #tpu.memory_space<vmem>>, vector<256x32xf32>
    %c0_1 = arith.constant 0 : index
    %c0_2 = arith.constant 0 : index
    %1 = vector.load %arg2[%c0_1, %c0_2] : memref<32x64xf32, #tpu.memory_space<vmem>>, vector<32x64xf32>
    %cst = arith.constant dense<0.000000e+00> : vector<256x64xf32>
    %2 = tpu.matmul %0, %1, %cst {dimension_numbers = #tpu.dot_dimension_numbers<[1], [0], [0], [1], [0, 0, 1, 1], [], []>} : vector<256x32xf32>, vector<32x64xf32>, vector<256x64xf32> -> vector<256x64xf32>
    %c0_3 = arith.constant 0 : index
    %c0_4 = arith.constant 0 : index
    %3 = vector.load %arg3[%c0_3, %c0_4] : memref<1x64xf32, #tpu.memory_space<vmem>>, vector<1x64xf32>
    %4 = vector.broadcast %3 : vector<1x64xf32> to vector<256x64xf32>
    %5 = arith.addf %2, %4 : vector<256x64xf32>
    %cst_5 = arith.constant 0.000000e+00 : f32
    %6 = vector.broadcast %cst_5 : f32 to vector<256x64xf32>
    %7 = arith.maximumf %5, %6 : vector<256x64xf32>
    %c0_6 = arith.constant 0 : index
    %c0_7 = arith.constant 0 : index
    %8 = vector.load %arg4[%c0_6, %c0_7] : memref<64x32xf32, #tpu.memory_space<vmem>>, vector<64x32xf32>
    %cst_8 = arith.constant dense<0.000000e+00> : vector<256x32xf32>
    %9 = tpu.matmul %7, %8, %cst_8 {dimension_numbers = #tpu.dot_dimension_numbers<[1], [0], [0], [1], [0, 0, 1, 1], [], []>} : vector<256x64xf32>, vector<64x32xf32>, vector<256x32xf32> -> vector<256x32xf32>
    %c0_9 = arith.constant 0 : index
    %c0_10 = arith.constant 0 : index
    %10 = vector.load %arg5[%c0_9, %c0_10] : memref<1x32xf32, #tpu.memory_space<vmem>>, vector<1x32xf32>
    %11 = vector.broadcast %10 : vector<1x32xf32> to vector<256x32xf32>
    %12 = arith.addf %9, %11 : vector<256x32xf32>
    %cst_11 = arith.constant 0.000000e+00 : f32
    %13 = vector.broadcast %cst_11 : f32 to vector<256x32xf32>
    %14 = arith.maximumf %12, %13 : vector<256x32xf32>
    %c0_12 = arith.constant 0 : index
    %c0_13 = arith.constant 0 : index
    %15 = vector.load %arg6[%c0_12, %c0_13] : memref<1x32xf32, #tpu.memory_space<vmem>>, vector<1x32xf32>
    %16 = vector.broadcast %15 : vector<1x32xf32> to vector<256x32xf32>
    %17 = arith.mulf %14, %16 : vector<256x32xf32>
    %cst_14 = arith.constant dense<0.000000e+00> : vector<256xf32>
    %18 = vector.multi_reduction <add>, %17, %cst_14 [1] : vector<256x32xf32> to vector<256xf32>
    %19 = vector.shape_cast %18 : vector<256xf32> to vector<256x1xf32>
    %c0_15 = arith.constant 0 : index
    %c0_16 = arith.constant 0 : index
    %20 = vector.load %arg7[%c0_15, %c0_16] : memref<1x1xf32, #tpu.memory_space<vmem>>, vector<1x1xf32>
    %21 = vector.broadcast %20 : vector<1x1xf32> to vector<256x1xf32>
    %22 = arith.addf %19, %21 : vector<256x1xf32>
    %cst_17 = arith.constant 0.000000e+00 : f32
    %23 = vector.broadcast %cst_17 : f32 to vector<256x1xf32>
    %24 = arith.maximumf %22, %23 : vector<256x1xf32>
    %c0_18 = arith.constant 0 : index
    %c0_19 = arith.constant 0 : index
    %25 = vector.load %arg8[%c0_18, %c0_19] : memref<256x1xf32, #tpu.memory_space<vmem>>, vector<256x1xf32>
    tpu.vector_store %arg8[%c0_18, %c0_19], %24 {strides = array<i32>} : memref<256x1xf32, #tpu.memory_space<vmem>>, vector<256x1xf32>,
    return
  }
  func.func @transform_0(%arg0: i32) -> (i32, i32) {
    %c0_i32 = arith.constant 0 : i32
    %c0_i32_0 = arith.constant 0 : i32
    return %arg0, %c0_i32 : i32, i32
  }
  func.func @transform_1(%arg0: i32) -> (i32, i32) {
    %c0_i32 = arith.constant 0 : i32
    %c0_i32_0 = arith.constant 0 : i32
    %c0_i32_1 = arith.constant 0 : i32
    return %c0_i32, %c0_i32_0 : i32, i32
  }
  func.func @transform_2(%arg0: i32) -> (i32, i32) {
    %c0_i32 = arith.constant 0 : i32
    %c0_i32_0 = arith.constant 0 : i32
    %c0_i32_1 = arith.constant 0 : i32
    return %c0_i32, %c0_i32_0 : i32, i32
  }
  func.func @transform_3(%arg0: i32) -> (i32, i32) {
    %c0_i32 = arith.constant 0 : i32
    %c0_i32_0 = arith.constant 0 : i32
    %c0_i32_1 = arith.constant 0 : i32
    return %c0_i32, %c0_i32_0 : i32, i32
  }
  func.func @transform_4(%arg0: i32) -> (i32, i32) {
    %c0_i32 = arith.constant 0 : i32
    %c0_i32_0 = arith.constant 0 : i32
    %c0_i32_1 = arith.constant 0 : i32
    return %c0_i32, %c0_i32_0 : i32, i32
  }
  func.func @transform_5(%arg0: i32) -> (i32, i32) {
    %c0_i32 = arith.constant 0 : i32
    %c0_i32_0 = arith.constant 0 : i32
    %c0_i32_1 = arith.constant 0 : i32
    return %c0_i32, %c0_i32_0 : i32, i32
  }
  func.func @transform_6(%arg0: i32) -> (i32, i32) {
    %c0_i32 = arith.constant 0 : i32
    %c0_i32_0 = arith.constant 0 : i32
    %c0_i32_1 = arith.constant 0 : i32
    return %c0_i32, %c0_i32_0 : i32, i32
  }
  func.func @transform_7(%arg0: i32) -> (i32, i32) {
    %c0_i32 = arith.constant 0 : i32
    %c0_i32_0 = arith.constant 0 : i32
    return %arg0, %c0_i32 : i32, i32
  }
}

</mosaic_0001>

<llo_original>
// kernel: custom_model_forward.1
$region0: #{custom_model_forward.1}
  #allocation0 [shape = 'u32[]', space=smem, size = 0x4, offset = 0x4, fixed_abs, tag = 'smem constant byte address 0x4 - core index']
  #allocation1 [shape = 'u32[72,128]{1,0:T(1,128)}', space=vmem, size = 0x9000, scoped, tag = 'internal scratch']
  #allocation2 [shape = 'f32[1,1]{1,0:T(1,128)S(1)}', space=vmem, size = 0x200, scoped, tag = 'scoped memory for custom_model_forward.1']
  %s0 = inlined_call_operand.vmem [shape: f32[512,32], index: 0, kind: input, shape index: {}]
  %s1 = inlined_call_operand.vmem [shape: f32[32,64], index: 1, kind: input, shape index: {}]
  %s2 = inlined_call_operand.vmem [shape: f32[1,64], index: 2, kind: input, shape index: {}]
  %s3 = inlined_call_operand.vmem [shape: f32[64,32], index: 3, kind: input, shape index: {}]
  %s4 = inlined_call_operand.vmem [shape: f32[1,32], index: 4, kind: input, shape index: {}]
  %s5 = inlined_call_operand.vmem [shape: f32[1,32], index: 5, kind: input, shape index: {}]
  %s6 = inlined_call_operand.<no memory space> [shape: f32[1,1], index: 6, kind: input, shape index: {}]
  %s7 = inlined_call_operand.vmem [shape: f32[512,1], index: 7, kind: output, shape index: {}]
  %s8 = sld [smem:[#allocation0]]
  $region61: #{custom_model_forward.1} parent=0
    _
  %s10 = ssub.s32 1, %s8
  %s11 = scalar_select 0, %s10, %s8
  %v12 = vstv %s6
  %13 = vst [vmem:[#allocation2] sm:$0x1] %v12
  loop: start=0, step=1, limit=4
  $region2: #{custom_model_forward.1} parent=0 // loop_pre_header
    _
  $region3: #{custom_model_forward.1} parent=0 // loop_header
    %s15 = sphi 0, %s19
    %p16 = scmp.ge.s32.totalorder %s15, 4
    %s25 = sphi 0, %s27
    %s28 = sphi 0, %s25
    %s29 = sphi 0, %s28
    %s45 = sphi 0, %s29
    %s49 = sphi 0, %s49
    %s51 = sphi 0, %s49
    %s52 = sphi 0, %s51
    %s66 = sphi 0, %s52
    %s70 = sphi 0, %s70
    %s72 = sphi 0, %s70
    %s73 = sphi 0, %s72
    %s87 = sphi 0, %s73
    %s91 = sphi 0, %s91
    %s93 = sphi 0, %s91
    %s94 = sphi 0, %s93
    %s108 = sphi 0, %s94
    %s112 = sphi 0, %s112
    %s114 = sphi 0, %s112
    %s115 = sphi 0, %s114
    %s129 = sphi 0, %s115
    %s133 = sphi 0, %s133
    %s135 = sphi 0, %s133
    %s136 = sphi 0, %s135
    %s150 = sphi 0, %s136
    %s154 = sphi 0, %s154
    %s156 = sphi 0, %s154
    %s157 = sphi 0, %s156
    %s171 = sphi 0, %s157
    %s177 = sphi 0, %s179
    %s180 = sphi 0, %s177
    %s181 = sphi 0, %s180
    %s197 = sphi 0, %s181
  $region4: #{custom_model_forward.1} parent=0 // loop_header_branch
    %18 = sbr.rel (%p16) target = $region8
  $region5: #{custom_model_forward.1} parent=0 // loop_body
    %s20 = ssub.s32 %s15, 1
    %s21 = ssub.s32 %s15, 2
    %s22 = sadd.s32 %s15, 1
    %s23 = ssub.s32 %s15, %s22
    %p24 = scmp.eq.s32.totalorder %s23, 0
    %s26 = sadd.s32 %s25, 1
    %s27 = scalar_select %p24, %s25, %s26
    %p30 = pneg %p24
    %p31 = scmp.eq.s32.totalorder %s15, 1
    %p32 = por %p30, %p31
    %p33 = scmp.ne.s32.totalorder %s25, %s28
    %p34 = scmp.eq.s32.totalorder %s15, 0
    %p35 = por %p33, %p34
    %p36 = scmp.ne.s32.totalorder %s25, %s28
    %p37 = scmp.eq.s32.totalorder %s20, 1
    %p38 = por %p36, %p37
    %p39 = scmp.ne.s32.totalorder %s28, %s29
    %p40 = scmp.eq.s32.totalorder %s20, 0
    %p41 = por %p39, %p40
    %p42 = scmp.ne.s32.totalorder %s28, %s29
    %p43 = scmp.eq.s32.totalorder %s21, 1
    %p44 = por %p42, %p43
    %p46 = scmp.ne.s32.totalorder %s29, %s45
    %p47 = scmp.eq.s32.totalorder %s21, 0
    %p48 = por %p46, %p47
    %s50 = sadd.s32 %s49, 1
    %p53 = scmp.eq.s32.totalorder %s15, 1
    %p54 = scmp.ne.s32.totalorder %s49, %s51
    %p55 = scmp.eq.s32.totalorder %s15, 0
    %p56 = por %p54, %p55
    %p57 = scmp.ne.s32.totalorder %s49, %s51
    %p58 = scmp.eq.s32.totalorder %s20, 1
    %p59 = por %p57, %p58
    %p60 = scmp.ne.s32.totalorder %s51, %s52
    %p61 = scmp.eq.s32.totalorder %s20, 0
    %p62 = por %p60, %p61
    %p63 = scmp.ne.s32.totalorder %s51, %s52
    %p64 = scmp.eq.s32.totalorder %s21, 1
    %p65 = por %p63, %p64
    %p67 = scmp.ne.s32.totalorder %s52, %s66
    %p68 = scmp.eq.s32.totalorder %s21, 0
    %p69 = por %p67, %p68
    %s71 = sadd.s32 %s70, 1
    %p74 = scmp.eq.s32.totalorder %s15, 1
    %p75 = scmp.ne.s32.totalorder %s70, %s72
    %p76 = scmp.eq.s32.totalorder %s15, 0
    %p77 = por %p75, %p76
    %p78 = scmp.ne.s32.totalorder %s70, %s72
    %p79 = scmp.eq.s32.totalorder %s20, 1
    %p80 = por %p78, %p79
    %p81 = scmp.ne.s32.totalorder %s72, %s73
    %p82 = scmp.eq.s32.totalorder %s20, 0
    %p83 = por %p81, %p82
    %p84 = scmp.ne.s32.totalorder %s72, %s73
    %p85 = scmp.eq.s32.totalorder %s21, 1
    %p86 = por %p84, %p85
    %p88 = scmp.ne.s32.totalorder %s73, %s87
    %p89 = scmp.eq.s32.totalorder %s21, 0
    %p90 = por %p88, %p89
    %s92 = sadd.s32 %s91, 1
    %p95 = scmp.eq.s32.totalorder %s15, 1
    %p96 = scmp.ne.s32.totalorder %s91, %s93
    %p97 = scmp.eq.s32.totalorder %s15, 0
    %p98 = por %p96, %p97
    %p99 = scmp.ne.s32.totalorder %s91, %s93
    %p100 = scmp.eq.s32.totalorder %s20, 1
    %p101 = por %p99, %p100
    %p102 = scmp.ne.s32.totalorder %s93, %s94
    %p103 = scmp.eq.s32.totalorder %s20, 0
    %p104 = por %p102, %p103
    %p105 = scmp.ne.s32.totalorder %s93, %s94
    %p106 = scmp.eq.s32.totalorder %s21, 1
    %p107 = por %p105, %p106
    %p109 = scmp.ne.s32.totalorder %s94, %s108
    %p110 = scmp.eq.s32.totalorder %s21, 0
    %p111 = por %p109, %p110
    %s113 = sadd.s32 %s112, 1
    %p116 = scmp.eq.s32.totalorder %s15, 1
    %p117 = scmp.ne.s32.totalorder %s112, %s114
    %p118 = scmp.eq.s32.totalorder %s15, 0
    %p119 = por %p117, %p118
    %p120 = scmp.ne.s32.totalorder %s112, %s114
    %p121 = scmp.eq.s32.totalorder %s20, 1
    %p122 = por %p120, %p121
    %p123 = scmp.ne.s32.totalorder %s114, %s115
    %p124 = scmp.eq.s32.totalorder %s20, 0
    %p125 = por %p123, %p124
    %p126 = scmp.ne.s32.totalorder %s114, %s115
    %p127 = scmp.eq.s32.totalorder %s21, 1
    %p128 = por %p126, %p127
    %p130 = scmp.ne.s32.totalorder %s115, %s129
    %p131 = scmp.eq.s32.totalorder %s21, 0
    %p132 = por %p130, %p131
    %s134 = sadd.s32 %s133, 1
    %p137 = scmp.eq.s32.totalorder %s15, 1
    %p138 = scmp.ne.s32.totalorder %s133, %s135
    %p139 = scmp.eq.s32.totalorder %s15, 0
    %p140 = por %p138, %p139
    %p141 = scmp.ne.s32.totalorder %s133, %s135
    %p142 = scmp.eq.s32.totalorder %s20, 1
    %p143 = por %p141, %p142
    %p144 = scmp.ne.s32.totalorder %s135, %s136
    %p145 = scmp.eq.s32.totalorder %s20, 0
    %p146 = por %p144, %p145
    %p147 = scmp.ne.s32.totalorder %s135, %s136
    %p148 = scmp.eq.s32.totalorder %s21, 1
    %p149 = por %p147, %p148
    %p151 = scmp.ne.s32.totalorder %s136, %s150
    %p152 = scmp.eq.s32.totalorder %s21, 0
    %p153 = por %p151, %p152
    %s155 = sadd.s32 %s154, 1
    %p158 = scmp.eq.s32.totalorder %s15, 1
    %p159 = scmp.ne.s32.totalorder %s154, %s156
    %p160 = scmp.eq.s32.totalorder %s15, 0
    %p161 = por %p159, %p160
    %p162 = scmp.ne.s32.totalorder %s154, %s156
    %p163 = scmp.eq.s32.totalorder %s20, 1
    %p164 = por %p162, %p163
    %p165 = scmp.ne.s32.totalorder %s156, %s157
    %p166 = scmp.eq.s32.totalorder %s20, 0
    %p167 = por %p165, %p166
    %p168 = scmp.ne.s32.totalorder %s156, %s157
    %p169 = scmp.eq.s32.totalorder %s21, 1
    %p170 = por %p168, %p169
    %p172 = scmp.ne.s32.totalorder %s157, %s171
    %p173 = scmp.eq.s32.totalorder %s21, 0
    %p174 = por %p172, %p173
    %s175 = ssub.s32 %s15, %s22
    %p176 = scmp.eq.s32.totalorder %s175, 0
    %s178 = sadd.s32 %s177, 1
    %s179 = scalar_select %p176, %s177, %s178
    %p182 = pneg %p176
    %p183 = scmp.eq.s32.totalorder %s15, 1
    %p184 = por %p182, %p183
    %p185 = scmp.ne.s32.totalorder %s177, %s180
    %p186 = scmp.eq.s32.totalorder %s15, 0
    %p187 = por %p185, %p186
    %p188 = scmp.ne.s32.totalorder %s177, %s180
    %p189 = scmp.eq.s32.totalorder %s20, 1
    %p190 = por %p188, %p189
    %p191 = scmp.ne.s32.totalorder %s180, %s181
    %p192 = scmp.eq.s32.totalorder %s20, 0
    %p193 = por %p191, %p192
    %p194 = scmp.ne.s32.totalorder %s180, %s181
    %p195 = scmp.eq.s32.totalorder %s21, 1
    %p196 = por %p194, %p195
    %p198 = scmp.ne.s32.totalorder %s181, %s197
    %p199 = scmp.eq.s32.totalorder %s21, 0
    %p200 = por %p198, %p199
    %p201 = scmp.le.s32.totalorder 1, %s15
    %p202 = scmp.lt.s32.totalorder %s15, 3
    %p203 = pnand %p201, %p202
    %p204 = pneg %p203
    // Predicated region
    $region9: #{custom_model_forward.1} parent=5 // pred_check
      _
    $region10: #{custom_model_forward.1} parent=5 // pred_check_branch
      %206 = sbr.rel (%p203) target = $region12
    $region11: #{custom_model_forward.1} parent=5 // pred_region
      %s207 = ssub.s32 %s15, 1
      // Predicated region
      $region13: #{custom_model_forward.1} parent=11 // pred_check
        %p208 = pneg %p62
      $region14: #{custom_model_forward.1} parent=11 // pred_check_branch
        %210 = sbr.rel (%p208) target = $region16
      $region15: #{custom_model_forward.1} parent=11 // pred_region
        _
      $region16: #{custom_model_forward.1} parent=11 // pred_fallthru
        _
      // Predicated region
      $region17: #{custom_model_forward.1} parent=11 // pred_check
        %p211 = pneg %p83
      $region18: #{custom_model_forward.1} parent=11 // pred_check_branch
        %213 = sbr.rel (%p211) target = $region20
      $region19: #{custom_model_forward.1} parent=11 // pred_region
        _
      $region20: #{custom_model_forward.1} parent=11 // pred_fallthru
        _
      // Predicated region
      $region21: #{custom_model_forward.1} parent=11 // pred_check
        %p214 = pneg %p104
      $region22: #{custom_model_forward.1} parent=11 // pred_check_branch
        %216 = sbr.rel (%p214) target = $region24
      $region23: #{custom_model_forward.1} parent=11 // pred_region
        _
      $region24: #{custom_model_forward.1} parent=11 // pred_fallthru
        _
      // Predicated region
      $region25: #{custom_model_forward.1} parent=11 // pred_check
        %p217 = pneg %p125
      $region26: #{custom_model_forward.1} parent=11 // pred_check_branch
        %219 = sbr.rel (%p217) target = $region28
      $region27: #{custom_model_forward.1} parent=11 // pred_region
        _
      $region28: #{custom_model_forward.1} parent=11 // pred_fallthru
        _
      // Predicated region
      $region29: #{custom_model_forward.1} parent=11 // pred_check
        %p220 = pneg %p146
      $region30: #{custom_model_forward.1} parent=11 // pred_check_branch
        %222 = sbr.rel (%p220) target = $region32
      $region31: #{custom_model_forward.1} parent=11 // pred_region
        _
      $region32: #{custom_model_forward.1} parent=11 // pred_fallthru
        _
      // Predicated region
      $region33: #{custom_model_forward.1} parent=11 // pred_check
        %p223 = pneg %p167
      $region34: #{custom_model_forward.1} parent=11 // pred_check_branch
        %225 = sbr.rel (%p223) target = $region36
      $region35: #{custom_model_forward.1} parent=11 // pred_region
        _
      $region36: #{custom_model_forward.1} parent=11 // pred_fallthru
        _
    $region12: #{custom_model_forward.1} parent=5 // pred_fallthru
      _
    %p226 = scmp.lt.s32.totalorder %s15, 2
    // Predicated region
    $region37: #{custom_model_forward.1} parent=5 // pred_check
      %p227 = pneg %p226
    $region38: #{custom_model_forward.1} parent=5 // pred_check_branch
      %229 = sbr.rel (%p227) target = $region40
    $region39: #{custom_model_forward.1} parent=5 // pred_region
      // Predicated region
      $region41: #{custom_model_forward.1} parent=39 // pred_check
        %p230 = pneg %p35
      $region42: #{custom_model_forward.1} parent=39 // pred_check_branch
        %232 = sbr.rel (%p230) target = $region44
      $region43: #{custom_model_forward.1} parent=39 // pred_region
        %s233 = smul.u32 32, %s15
        %p234 = scmp.lt.s32.totalorder %s233, 63
        %s235 = scalar_select %p234, %s233, 63
        %s236 = smul.addr %s235, 8
        %s237 = scalar_lea.vmem %s0, %s236
        %s238 = smul.u32 32, %s15
      $region44: #{custom_model_forward.1} parent=39 // pred_fallthru
        _
    $region40: #{custom_model_forward.1} parent=5 // pred_fallthru
      _
    %p239 = scmp.le.s32.totalorder 1, %s15
    %p240 = scmp.lt.s32.totalorder %s15, 3
    %p241 = pnand %p239, %p240
    %p242 = pneg %p241
    // Predicated region
    $region45: #{custom_model_forward.1} parent=5 // pred_check
      _
    $region46: #{custom_model_forward.1} parent=5 // pred_check_branch
      %244 = sbr.rel (%p241) target = $region48
    $region47: #{custom_model_forward.1} parent=5 // pred_region
      %s245 = ssub.s32 %s15, 1
      %s246 = smul.u32 32, %s20
      %p247 = scmp.lt.s32.totalorder %s246, 63
      %s248 = scalar_select %p247, %s246, 63
      %s249 = smul.addr %s248, 8
      %s250 = scalar_lea.vmem %s0, %s249
      %p251 = pneg %p41
      %p252 = pneg %p38
      %p253 = pneg %p62
      %p254 = pneg %p59
      %p255 = pneg %p83
      %p256 = pneg %p80
      %p257 = pneg %p104
      %p258 = pneg %p101
      %p259 = pneg %p125
      %p260 = pneg %p122
      %p261 = pneg %p146
      %p262 = pneg %p143
      %p263 = pneg %p167
      %p264 = pneg %p164
      %p265 = pneg %p193
      %p266 = pneg %p190
      %s267 = smul.u32 32, %s20
      %p268 = scmp.lt.s32.totalorder %s267, 63
      %s269 = scalar_select %p268, %s267, 63
      %s270 = smul.addr %s269, 8
      %s271 = scalar_lea.vmem %s7, %s270
      %s272 = smul.u32 32, %s20
      %p273 = scmp.lt.s32.totalorder %s272, 63
      %s274 = scalar_select %p273, %s272, 63
      %s275 = smul.addr %s274, 8
      %s276 = scalar_lea.vmem %s0, %s275
      %s277 = smul.u32 32, %s20
      %s278 = smul.u32 32, %s20
      %p279 = scmp.lt.s32.totalorder %s278, 63
      %s280 = scalar_select %p279, %s278, 63
      %s281 = smul.addr %s280, 8
      %s282 = scalar_lea.vmem %s7, %s281
      %s283 = smul.u32 32, %s20
      %v284 = vld [vmem:[%s276] sm:$0xff]
      %v285 = vld [vmem:[%s276 + $0x8] sm:$0xff]
      %v286 = vld [vmem:[%s276 + $0x10] sm:$0xff]
      %v287 = vld [vmem:[%s276 + $0x18] sm:$0xff]
      %v288 = vld [vmem:[%s276 + $0x20] sm:$0xff]
      %v289 = vld [vmem:[%s276 + $0x28] sm:$0xff]
      %v290 = vld [vmem:[%s276 + $0x30] sm:$0xff]
      %v291 = vld [vmem:[%s276 + $0x38] sm:$0xff]
      %v292 = vld [vmem:[%s276 + $0x40] sm:$0xff]
      %v293 = vld [vmem:[%s276 + $0x48] sm:$0xff]
      %v294 = vld [vmem:[%s276 + $0x50] sm:$0xff]
      %v295 = vld [vmem:[%s276 + $0x58] sm:$0xff]
      %v296 = vld [vmem:[%s276 + $0x60] sm:$0xff]
      %v297 = vld [vmem:[%s276 + $0x68] sm:$0xff]
      %v298 = vld [vmem:[%s276 + $0x70] sm:$0xff]
      %v299 = vld [vmem:[%s276 + $0x78] sm:$0xff]
      %v300 = vld [vmem:[%s276 + $0x80] sm:$0xff]
      %v301 = vld [vmem:[%s276 + $0x88] sm:$0xff]
      %v302 = vld [vmem:[%s276 + $0x90] sm:$0xff]
      %v303 = vld [vmem:[%s276 + $0x98] sm:$0xff]
      %v304 = vld [vmem:[%s276 + $0xa0] sm:$0xff]
      %v305 = vld [vmem:[%s276 + $0xa8] sm:$0xff]
      %v306 = vld [vmem:[%s276 + $0xb0] sm:$0xff]
      %v307 = vld [vmem:[%s276 + $0xb8] sm:$0xff]
      %v308 = vld [vmem:[%s276 + $0xc0] sm:$0xff]
      %v309 = vld [vmem:[%s276 + $0xc8] sm:$0xff]
      %v310 = vld [vmem:[%s276 + $0xd0] sm:$0xff]
      %v311 = vld [vmem:[%s276 + $0xd8] sm:$0xff]
      %v312 = vld [vmem:[%s276 + $0xe0] sm:$0xff]
      %v313 = vld [vmem:[%s276 + $0xe8] sm:$0xff]
      %v314 = vld [vmem:[%s276 + $0xf0] sm:$0xff]
      %v315 = vld [vmem:[%s276 + $0xf8] sm:$0xff]
      %v316 = vld [vmem:[%s1] sm:$0xff]
      %v317 = vld [vmem:[%s1 + $0x8] sm:$0xff]
      %v318 = vld [vmem:[%s1 + $0x10] sm:$0xff]
      %v319 = vld [vmem:[%s1 + $0x18] sm:$0xff]
      %v320 = vld [vmem:[%s2] sm:$0x1]
      %v322 = vperm.slane %v320, 0
      %vm324 = vcmask 261120
      %v326 = vsel %vm324, %v284, 0
      %v329 = vsel %vm324, %v285, 0
      %v332 = vsel %vm324, %v286, 0
      %v335 = vsel %vm324, %v287, 0
      %v338 = vsel %vm324, %v288, 0
      %v341 = vsel %vm324, %v289, 0
      %v344 = vsel %vm324, %v290, 0
      %v347 = vsel %vm324, %v291, 0
      %v350 = vsel %vm324, %v292, 0
      %v353 = vsel %vm324, %v293, 0
      %v356 = vsel %vm324, %v294, 0
      %v359 = vsel %vm324, %v295, 0
      %v362 = vsel %vm324, %v296, 0
      %v365 = vsel %vm324, %v297, 0
      %v368 = vsel %vm324, %v298, 0
      %v371 = vsel %vm324, %v299, 0
      %v374 = vsel %vm324, %v300, 0
      %v377 = vsel %vm324, %v301, 0
      %v380 = vsel %vm324, %v302, 0
      %v383 = vsel %vm324, %v303, 0
      %v386 = vsel %vm324, %v304, 0
      %v389 = vsel %vm324, %v305, 0
      %v392 = vsel %vm324, %v306, 0
      %v395 = vsel %vm324, %v307, 0
      %v398 = vsel %vm324, %v308, 0
      %v401 = vsel %vm324, %v309, 0
      %v404 = vsel %vm324, %v310, 0
      %v407 = vsel %vm324, %v311, 0
      %v410 = vsel %vm324, %v312, 0
      %v413 = vsel %vm324, %v313, 0
      %v416 = vsel %vm324, %v314, 0
      %v419 = vsel %vm324, %v315, 0
      %421 = vmatpush.msra.mxu0 0.0
      %422 = vmatpush.msra.mxu0 0.0
      %423 = vmatpush.msra.mxu0 0.0
      %424 = vmatpush.msra.mxu0 0.0
      %425 = vmatpush.msra.mxu0 0.0
      %426 = vmatpush.msra.mxu0 0.0
      %427 = vmatpush.msra.mxu0 0.0
      %428 = vmatpush.msra.mxu0 0.0
      %429 = vmatpush.msra.mxu0 0.0
      %430 = vmatpush.msra.mxu0 0.0
      %431 = vmatpush.msra.mxu0 0.0
      %432 = vmatpush.msra.mxu0 0.0
      %433 = vmatpush.msra.mxu0 %v319
      %434 = vmatpush.msra.mxu0 %v318
      %435 = vmatpush.msra.mxu0 %v317
      %436 = vmatpush.msra.mxu0 %v316
      %437 = vmatmul.f32.gmra.mxu0 %v326
      %v438 = vpop.f32.mrf.mxu0
      %v439 = vadd.f32 %v322, %v438
      %440 = vmatmul.f32.gmra.mxu0 %v329
      %v441 = vpop.f32.mrf.mxu0
      %v442 = vadd.f32 %v322, %v441
      %443 = vmatmul.f32.gmra.mxu0 %v332
      %v444 = vpop.f32.mrf.mxu0
      %v445 = vadd.f32 %v322, %v444
      %446 = vmatmul.f32.gmra.mxu0 %v335
      %v447 = vpop.f32.mrf.mxu0
      %v448 = vadd.f32 %v322, %v447
      %449 = vmatmul.f32.gmra.mxu0 %v338
      %v450 = vpop.f32.mrf.mxu0
      %v451 = vadd.f32 %v322, %v450
      %452 = vmatmul.f32.gmra.mxu0 %v341
      %v453 = vpop.f32.mrf.mxu0
      %v454 = vadd.f32 %v322, %v453
      %455 = vmatmul.f32.gmra.mxu0 %v344
      %v456 = vpop.f32.mrf.mxu0
      %v457 = vadd.f32 %v322, %v456
      %458 = vmatmul.f32.gmra.mxu0 %v347
      %v459 = vpop.f32.mrf.mxu0
      %v460 = vadd.f32 %v322, %v459
      %461 = vmatmul.f32.gmra.mxu0 %v350
      %v462 = vpop.f32.mrf.mxu0
      %v463 = vadd.f32 %v322, %v462
      %464 = vmatmul.f32.gmra.mxu0 %v353
      %v465 = vpop.f32.mrf.mxu0
      %v466 = vadd.f32 %v322, %v465
      %467 = vmatmul.f32.gmra.mxu0 %v356
      %v468 = vpop.f32.mrf.mxu0
      %v469 = vadd.f32 %v322, %v468
      %470 = vmatmul.f32.gmra.mxu0 %v359
      %v471 = vpop.f32.mrf.mxu0
      %v472 = vadd.f32 %v322, %v471
      %473 = vmatmul.f32.gmra.mxu0 %v362
      %v474 = vpop.f32.mrf.mxu0
      %v475 = vadd.f32 %v322, %v474
      %476 = vmatmul.f32.gmra.mxu0 %v365
      %v477 = vpop.f32.mrf.mxu0
      %v478 = vadd.f32 %v322, %v477
      %479 = vmatmul.f32.gmra.mxu0 %v368
      %v480 = vpop.f32.mrf.mxu0
      %v481 = vadd.f32 %v322, %v480
      %482 = vmatmul.f32.gmra.mxu0 %v371
      %v483 = vpop.f32.mrf.mxu0
      %v484 = vadd.f32 %v322, %v483
      %485 = vmatmul.f32.gmra.mxu0 %v374
      %v486 = vpop.f32.mrf.mxu0
      %v487 = vadd.f32 %v322, %v486
      %488 = vmatmul.f32.gmra.mxu0 %v377
      %v489 = vpop.f32.mrf.mxu0
      %v490 = vadd.f32 %v322, %v489
      %491 = vmatmul.f32.gmra.mxu0 %v380
      %v492 = vpop.f32.mrf.mxu0
      %v493 = vadd.f32 %v322, %v492
      %494 = vmatmul.f32.gmra.mxu0 %v383
      %v495 = vpop.f32.mrf.mxu0
      %v496 = vadd.f32 %v322, %v495
      %497 = vmatmul.f32.gmra.mxu0 %v386
      %v498 = vpop.f32.mrf.mxu0
      %v499 = vadd.f32 %v322, %v498
      %500 = vmatmul.f32.gmra.mxu0 %v389
      %v501 = vpop.f32.mrf.mxu0
      %v502 = vadd.f32 %v322, %v501
      %503 = vmatmul.f32.gmra.mxu0 %v392
      %v504 = vpop.f32.mrf.mxu0
      %v505 = vadd.f32 %v322, %v504
      %506 = vmatmul.f32.gmra.mxu0 %v395
      %v507 = vpop.f32.mrf.mxu0
      %v508 = vadd.f32 %v322, %v507
      %509 = vmatmul.f32.gmra.mxu0 %v398
      %v510 = vpop.f32.mrf.mxu0
      %v511 = vadd.f32 %v322, %v510
      %512 = vmatmul.f32.gmra.mxu0 %v401
      %v513 = vpop.f32.mrf.mxu0
      %v514 = vadd.f32 %v322, %v513
      %515 = vmatmul.f32.gmra.mxu0 %v404
      %v516 = vpop.f32.mrf.mxu0
      %v517 = vadd.f32 %v322, %v516
      %518 = vmatmul.f32.gmra.mxu0 %v407
      %v519 = vpop.f32.mrf.mxu0
      %v520 = vadd.f32 %v322, %v519
      %521 = vmatmul.f32.gmra.mxu0 %v410
      %v522 = vpop.f32.mrf.mxu0
      %v523 = vadd.f32 %v322, %v522
      %524 = vmatmul.f32.gmra.mxu0 %v413
      %v525 = vpop.f32.mrf.mxu0
      %v526 = vadd.f32 %v322, %v525
      %527 = vmatmul.f32.gmra.mxu0 %v416
      %v528 = vpop.f32.mrf.mxu0
      %v529 = vadd.f32 %v322, %v528
      %530 = vmatmul.f32.gmra.mxu0 %v419
      %v531 = vpop.f32.mrf.mxu0
      %v532 = vadd.f32 %v322, %v531
      %533 = vdwg.mxu0
      %v534 = vmax.f32 %v439, 0.0
      %v535 = vmax.f32 %v442, 0.0
      %v536 = vmax.f32 %v445, 0.0
      %v537 = vmax.f32 %v448, 0.0
      %v538 = vmax.f32 %v451, 0.0
      %v539 = vmax.f32 %v454, 0.0
      %v540 = vmax.f32 %v457, 0.0
      %v541 = vmax.f32 %v460, 0.0
      %v542 = vmax.f32 %v463, 0.0
      %v543 = vmax.f32 %v466, 0.0
      %v544 = vmax.f32 %v469, 0.0
      %v545 = vmax.f32 %v472, 0.0
      %v546 = vmax.f32 %v475, 0.0
      %v547 = vmax.f32 %v478, 0.0
      %v548 = vmax.f32 %v481, 0.0
      %v549 = vmax.f32 %v484, 0.0
      %v550 = vmax.f32 %v487, 0.0
      %v551 = vmax.f32 %v490, 0.0
      %v552 = vmax.f32 %v493, 0.0
      %v553 = vmax.f32 %v496, 0.0
      %v554 = vmax.f32 %v499, 0.0
      %v555 = vmax.f32 %v502, 0.0
      %v556 = vmax.f32 %v505, 0.0
      %v557 = vmax.f32 %v508, 0.0
      %v558 = vmax.f32 %v511, 0.0
      %v559 = vmax.f32 %v514, 0.0
      %v560 = vmax.f32 %v517, 0.0
      %v561 = vmax.f32 %v520, 0.0
      %v562 = vmax.f32 %v523, 0.0
      %v563 = vmax.f32 %v526, 0.0
      %v564 = vmax.f32 %v529, 0.0
      %v565 = vmax.f32 %v532, 0.0
      %v566 = vld [vmem:[%s3] sm:$0xff]
      %v567 = vld [vmem:[%s3 + $0x8] sm:$0xff]
      %v568 = vld [vmem:[%s3 + $0x10] sm:$0xff]
      %v569 = vld [vmem:[%s3 + $0x18] sm:$0xff]
      %v570 = vld [vmem:[%s3 + $0x20] sm:$0xff]
      %v571 = vld [vmem:[%s3 + $0x28] sm:$0xff]
      %v572 = vld [vmem:[%s3 + $0x30] sm:$0xff]
      %v573 = vld [vmem:[%s3 + $0x38] sm:$0xff]
      %v574 = vld [vmem:[%s4] sm:$0x1]
      %v576 = vperm.slane %v574, 0
      %vm578 = vcmask 523264
      %v580 = vsel %vm578, %v534, 0
      %v583 = vsel %vm578, %v535, 0
      %v586 = vsel %vm578, %v536, 0
      %v589 = vsel %vm578, %v537, 0
      %v592 = vsel %vm578, %v538, 0
      %v595 = vsel %vm578, %v539, 0
      %v598 = vsel %vm578, %v540, 0
      %v601 = vsel %vm578, %v541, 0
      %v604 = vsel %vm578, %v542, 0
      %v607 = vsel %vm578, %v543, 0
      %v610 = vsel %vm578, %v544, 0
      %v613 = vsel %vm578, %v545, 0
      %v616 = vsel %vm578, %v546, 0
      %v619 = vsel %vm578, %v547, 0
      %v622 = vsel %vm578, %v548, 0
      %v625 = vsel %vm578, %v549, 0
      %v628 = vsel %vm578, %v550, 0
      %v631 = vsel %vm578, %v551, 0
      %v634 = vsel %vm578, %v552, 0
      %v637 = vsel %vm578, %v553, 0
      %v640 = vsel %vm578, %v554, 0
      %v643 = vsel %vm578, %v555, 0
      %v646 = vsel %vm578, %v556, 0
      %v649 = vsel %vm578, %v557, 0
      %v652 = vsel %vm578, %v558, 0
      %v655 = vsel %vm578, %v559, 0
      %v658 = vsel %vm578, %v560, 0
      %v661 = vsel %vm578, %v561, 0
      %v664 = vsel %vm578, %v562, 0
      %v667 = vsel %vm578, %v563, 0
      %v670 = vsel %vm578, %v564, 0
      %v673 = vsel %vm578, %v565, 0
      %675 = vmatpush.msra.mxu0 0.0
      %676 = vmatpush.msra.mxu0 0.0
      %677 = vmatpush.msra.mxu0 0.0
      %678 = vmatpush.msra.mxu0 0.0
      %679 = vmatpush.msra.mxu0 0.0
      %680 = vmatpush.msra.mxu0 0.0
      %681 = vmatpush.msra.mxu0 0.0
      %682 = vmatpush.msra.mxu0 0.0
      %683 = vmatpush.msra.mxu0 %v573
      %684 = vmatpush.msra.mxu0 %v572
      %685 = vmatpush.msra.mxu0 %v571
      %686 = vmatpush.msra.mxu0 %v570
      %687 = vmatpush.msra.mxu0 %v569
      %688 = vmatpush.msra.mxu0 %v568
      %689 = vmatpush.msra.mxu0 %v567
      %690 = vmatpush.msra.mxu0 %v566
      %691 = vmatmul.f32.gmra.mxu0 %v580
      %v692 = vpop.f32.mrf.mxu0
      %v693 = vadd.f32 %v576, %v692
      %694 = vmatmul.f32.gmra.mxu0 %v583
      %v695 = vpop.f32.mrf.mxu0
      %v696 = vadd.f32 %v576, %v695
      %697 = vmatmul.f32.gmra.mxu0 %v586
      %v698 = vpop.f32.mrf.mxu0
      %v699 = vadd.f32 %v576, %v698
      %700 = vmatmul.f32.gmra.mxu0 %v589
      %v701 = vpop.f32.mrf.mxu0
      %v702 = vadd.f32 %v576, %v701
      %703 = vmatmul.f32.gmra.mxu0 %v592
      %v704 = vpop.f32.mrf.mxu0
      %v705 = vadd.f32 %v576, %v704
      %706 = vmatmul.f32.gmra.mxu0 %v595
      %v707 = vpop.f32.mrf.mxu0
      %v708 = vadd.f32 %v576, %v707
      %709 = vmatmul.f32.gmra.mxu0 %v598
      %v710 = vpop.f32.mrf.mxu0
      %v711 = vadd.f32 %v576, %v710
      %712 = vmatmul.f32.gmra.mxu0 %v601
      %v713 = vpop.f32.mrf.mxu0
      %v714 = vadd.f32 %v576, %v713
      %715 = vmatmul.f32.gmra.mxu0 %v604
      %v716 = vpop.f32.mrf.mxu0
      %v717 = vadd.f32 %v576, %v716
      %718 = vmatmul.f32.gmra.mxu0 %v607
      %v719 = vpop.f32.mrf.mxu0
      %v720 = vadd.f32 %v576, %v719
      %721 = vmatmul.f32.gmra.mxu0 %v610
      %v722 = vpop.f32.mrf.mxu0
      %v723 = vadd.f32 %v576, %v722
      %724 = vmatmul.f32.gmra.mxu0 %v613
      %v725 = vpop.f32.mrf.mxu0
      %v726 = vadd.f32 %v576, %v725
      %727 = vmatmul.f32.gmra.mxu0 %v616
      %v728 = vpop.f32.mrf.mxu0
      %v729 = vadd.f32 %v576, %v728
      %730 = vmatmul.f32.gmra.mxu0 %v619
      %v731 = vpop.f32.mrf.mxu0
      %v732 = vadd.f32 %v576, %v731
      %733 = vmatmul.f32.gmra.mxu0 %v622
      %v734 = vpop.f32.mrf.mxu0
      %v735 = vadd.f32 %v576, %v734
      %736 = vmatmul.f32.gmra.mxu0 %v625
      %v737 = vpop.f32.mrf.mxu0
      %v738 = vadd.f32 %v576, %v737
      %739 = vmatmul.f32.gmra.mxu0 %v628
      %v740 = vpop.f32.mrf.mxu0
      %v741 = vadd.f32 %v576, %v740
      %742 = vmatmul.f32.gmra.mxu0 %v631
      %v743 = vpop.f32.mrf.mxu0
      %v744 = vadd.f32 %v576, %v743
      %745 = vmatmul.f32.gmra.mxu0 %v634
      %v746 = vpop.f32.mrf.mxu0
      %v747 = vadd.f32 %v576, %v746
      %748 = vmatmul.f32.gmra.mxu0 %v637
      %v749 = vpop.f32.mrf.mxu0
      %v750 = vadd.f32 %v576, %v749
      %751 = vmatmul.f32.gmra.mxu0 %v640
      %v752 = vpop.f32.mrf.mxu0
      %v753 = vadd.f32 %v576, %v752
      %754 = vmatmul.f32.gmra.mxu0 %v643
      %v755 = vpop.f32.mrf.mxu0
      %v756 = vadd.f32 %v576, %v755
      %757 = vmatmul.f32.gmra.mxu0 %v646
      %v758 = vpop.f32.mrf.mxu0
      %v759 = vadd.f32 %v576, %v758
      %760 = vmatmul.f32.gmra.mxu0 %v649
      %v761 = vpop.f32.mrf.mxu0
      %v762 = vadd.f32 %v576, %v761
      %763 = vmatmul.f32.gmra.mxu0 %v652
      %v764 = vpop.f32.mrf.mxu0
      %v765 = vadd.f32 %v576, %v764
      %766 = vmatmul.f32.gmra.mxu0 %v655
      %v767 = vpop.f32.mrf.mxu0
      %v768 = vadd.f32 %v576, %v767
      %769 = vmatmul.f32.gmra.mxu0 %v658
      %v770 = vpop.f32.mrf.mxu0
      %v771 = vadd.f32 %v576, %v770
      %772 = vmatmul.f32.gmra.mxu0 %v661
      %v773 = vpop.f32.mrf.mxu0
      %v774 = vadd.f32 %v576, %v773
      %775 = vmatmul.f32.gmra.mxu0 %v664
      %v776 = vpop.f32.mrf.mxu0
      %v777 = vadd.f32 %v576, %v776
      %778 = vmatmul.f32.gmra.mxu0 %v667
      %v779 = vpop.f32.mrf.mxu0
      %v780 = vadd.f32 %v576, %v779
      %781 = vmatmul.f32.gmra.mxu0 %v670
      %v782 = vpop.f32.mrf.mxu0
      %v783 = vadd.f32 %v576, %v782
      %784 = vmatmul.f32.gmra.mxu0 %v673
      %v785 = vpop.f32.mrf.mxu0
      %v786 = vadd.f32 %v576, %v785
      %787 = vdwg.mxu0
      %v788 = vmax.f32 %v693, 0.0
      %v789 = vmax.f32 %v696, 0.0
      %v790 = vmax.f32 %v699, 0.0
      %v791 = vmax.f32 %v702, 0.0
      %v792 = vmax.f32 %v705, 0.0
      %v793 = vmax.f32 %v708, 0.0
      %v794 = vmax.f32 %v711, 0.0
      %v795 = vmax.f32 %v714, 0.0
      %v796 = vmax.f32 %v717, 0.0
      %v797 = vmax.f32 %v720, 0.0
      %v798 = vmax.f32 %v723, 0.0
      %v799 = vmax.f32 %v726, 0.0
      %v800 = vmax.f32 %v729, 0.0
      %v801 = vmax.f32 %v732, 0.0
      %v802 = vmax.f32 %v735, 0.0
      %v803 = vmax.f32 %v738, 0.0
      %v804 = vmax.f32 %v741, 0.0
      %v805 = vmax.f32 %v744, 0.0
      %v806 = vmax.f32 %v747, 0.0
      %v807 = vmax.f32 %v750, 0.0
      %v808 = vmax.f32 %v753, 0.0
      %v809 = vmax.f32 %v756, 0.0
      %v810 = vmax.f32 %v759, 0.0
      %v811 = vmax.f32 %v762, 0.0
      %v812 = vmax.f32 %v765, 0.0
      %v813 = vmax.f32 %v768, 0.0
      %v814 = vmax.f32 %v771, 0.0
      %v815 = vmax.f32 %v774, 0.0
      %v816 = vmax.f32 %v777, 0.0
      %v817 = vmax.f32 %v780, 0.0
      %v818 = vmax.f32 %v783, 0.0
      %v819 = vmax.f32 %v786, 0.0
      %v820 = vld [vmem:[%s5] sm:$0x1]
      %v822 = vperm.slane %v820, 0
      %v824 = vmul.f32 %v788, %v822
      %v825 = vmul.f32 %v789, %v822
      %v826 = vmul.f32 %v790, %v822
      %v827 = vmul.f32 %v791, %v822
      %v828 = vmul.f32 %v792, %v822
      %v829 = vmul.f32 %v793, %v822
      %v830 = vmul.f32 %v794, %v822
      %v831 = vmul.f32 %v795, %v822
      %v832 = vmul.f32 %v796, %v822
      %v833 = vmul.f32 %v797, %v822
      %v834 = vmul.f32 %v798, %v822
      %v835 = vmul.f32 %v799, %v822
      %v836 = vmul.f32 %v800, %v822
      %v837 = vmul.f32 %v801, %v822
      %v838 = vmul.f32 %v802, %v822
      %v839 = vmul.f32 %v803, %v822
      %v840 = vmul.f32 %v804, %v822
      %v841 = vmul.f32 %v805, %v822
      %v842 = vmul.f32 %v806, %v822
      %v843 = vmul.f32 %v807, %v822
      %v844 = vmul.f32 %v808, %v822
      %v845 = vmul.f32 %v809, %v822
      %v846 = vmul.f32 %v810, %v822
      %v847 = vmul.f32 %v811, %v822
      %v848 = vmul.f32 %v812, %v822
      %v849 = vmul.f32 %v813, %v822
      %v850 = vmul.f32 %v814, %v822
      %v851 = vmul.f32 %v815, %v822
      %v852 = vmul.f32 %v816, %v822
      %v853 = vmul.f32 %v817, %v822
      %v854 = vmul.f32 %v818, %v822
      %v855 = vmul.f32 %v819, %v822
      %v856 = vsel %vm324, %v824, 0.0
      %857 = vadd.xlane.f32.xlu0 %v856
      %v858 = vpop.xlane.xlu0 %857
      %v859 = vsel %vm324, %v825, 0.0
      %860 = vadd.xlane.f32.xlu0 %v859
      %v861 = vpop.xlane.xlu0 %860
      %v862 = vsel %vm324, %v826, 0.0
      %863 = vadd.xlane.f32.xlu0 %v862
      %v864 = vpop.xlane.xlu0 %863
      %v865 = vsel %vm324, %v827, 0.0
      %866 = vadd.xlane.f32.xlu0 %v865
      %v867 = vpop.xlane.xlu0 %866
      %v868 = vsel %vm324, %v828, 0.0
      %869 = vadd.xlane.f32.xlu0 %v868
      %v870 = vpop.xlane.xlu0 %869
      %v871 = vsel %vm324, %v829, 0.0
      %872 = vadd.xlane.f32.xlu0 %v871
      %v873 = vpop.xlane.xlu0 %872
      %v874 = vsel %vm324, %v830, 0.0
      %875 = vadd.xlane.f32.xlu0 %v874
      %v876 = vpop.xlane.xlu0 %875
      %v877 = vsel %vm324, %v831, 0.0
      %878 = vadd.xlane.f32.xlu0 %v877
      %v879 = vpop.xlane.xlu0 %878
      %v880 = vsel %vm324, %v832, 0.0
      %881 = vadd.xlane.f32.xlu0 %v880
      %v882 = vpop.xlane.xlu0 %881
      %v883 = vsel %vm324, %v833, 0.0
      %884 = vadd.xlane.f32.xlu0 %v883
      %v885 = vpop.xlane.xlu0 %884
      %v886 = vsel %vm324, %v834, 0.0
      %887 = vadd.xlane.f32.xlu0 %v886
      %v888 = vpop.xlane.xlu0 %887
      %v889 = vsel %vm324, %v835, 0.0
      %890 = vadd.xlane.f32.xlu0 %v889
      %v891 = vpop.xlane.xlu0 %890
      %v892 = vsel %vm324, %v836, 0.0
      %893 = vadd.xlane.f32.xlu0 %v892
      %v894 = vpop.xlane.xlu0 %893
      %v895 = vsel %vm324, %v837, 0.0
      %896 = vadd.xlane.f32.xlu0 %v895
      %v897 = vpop.xlane.xlu0 %896
      %v898 = vsel %vm324, %v838, 0.0
      %899 = vadd.xlane.f32.xlu0 %v898
      %v900 = vpop.xlane.xlu0 %899
      %v901 = vsel %vm324, %v839, 0.0
      %902 = vadd.xlane.f32.xlu0 %v901
      %v903 = vpop.xlane.xlu0 %902
      %v904 = vsel %vm324, %v840, 0.0
      %905 = vadd.xlane.f32.xlu0 %v904
      %v906 = vpop.xlane.xlu0 %905
      %v907 = vsel %vm324, %v841, 0.0
      %908 = vadd.xlane.f32.xlu0 %v907
      %v909 = vpop.xlane.xlu0 %908
      %v910 = vsel %vm324, %v842, 0.0
      %911 = vadd.xlane.f32.xlu0 %v910
      %v912 = vpop.xlane.xlu0 %911
      %v913 = vsel %vm324, %v843, 0.0
      %914 = vadd.xlane.f32.xlu0 %v913
      %v915 = vpop.xlane.xlu0 %914
      %v916 = vsel %vm324, %v844, 0.0
      %917 = vadd.xlane.f32.xlu0 %v916
      %v918 = vpop.xlane.xlu0 %917
      %v919 = vsel %vm324, %v845, 0.0
      %920 = vadd.xlane.f32.xlu0 %v919
      %v921 = vpop.xlane.xlu0 %920
      %v922 = vsel %vm324, %v846, 0.0
      %923 = vadd.xlane.f32.xlu0 %v922
      %v924 = vpop.xlane.xlu0 %923
      %v925 = vsel %vm324, %v847, 0.0
      %926 = vadd.xlane.f32.xlu0 %v925
      %v927 = vpop.xlane.xlu0 %926
      %v928 = vsel %vm324, %v848, 0.0
      %929 = vadd.xlane.f32.xlu0 %v928
      %v930 = vpop.xlane.xlu0 %929
      %v931 = vsel %vm324, %v849, 0.0
      %932 = vadd.xlane.f32.xlu0 %v931
      %v933 = vpop.xlane.xlu0 %932
      %v934 = vsel %vm324, %v850, 0.0
      %935 = vadd.xlane.f32.xlu0 %v934
      %v936 = vpop.xlane.xlu0 %935
      %v937 = vsel %vm324, %v851, 0.0
      %938 = vadd.xlane.f32.xlu0 %v937
      %v939 = vpop.xlane.xlu0 %938
      %v940 = vsel %vm324, %v852, 0.0
      %941 = vadd.xlane.f32.xlu0 %v940
      %v942 = vpop.xlane.xlu0 %941
      %v943 = vsel %vm324, %v853, 0.0
      %944 = vadd.xlane.f32.xlu0 %v943
      %v945 = vpop.xlane.xlu0 %944
      %v946 = vsel %vm324, %v854, 0.0
      %947 = vadd.xlane.f32.xlu0 %v946
      %v948 = vpop.xlane.xlu0 %947
      %v949 = vsel %vm324, %v855, 0.0
      %950 = vadd.xlane.f32.xlu0 %v949
      %v951 = vpop.xlane.xlu0 %950
      %v952 = vld [vmem:[#allocation2] sm:$0x1]
      %v954 = vperm.slane %v952, 0
      %v956 = vadd.f32 %v858, %v954
      %v957 = vadd.f32 %v861, %v954
      %v958 = vadd.f32 %v864, %v954
      %v959 = vadd.f32 %v867, %v954
      %v960 = vadd.f32 %v870, %v954
      %v961 = vadd.f32 %v873, %v954
      %v962 = vadd.f32 %v876, %v954
      %v963 = vadd.f32 %v879, %v954
      %v964 = vadd.f32 %v882, %v954
      %v965 = vadd.f32 %v885, %v954
      %v966 = vadd.f32 %v888, %v954
      %v967 = vadd.f32 %v891, %v954
      %v968 = vadd.f32 %v894, %v954
      %v969 = vadd.f32 %v897, %v954
      %v970 = vadd.f32 %v900, %v954
      %v971 = vadd.f32 %v903, %v954
      %v972 = vadd.f32 %v906, %v954
      %v973 = vadd.f32 %v909, %v954
      %v974 = vadd.f32 %v912, %v954
      %v975 = vadd.f32 %v915, %v954
      %v976 = vadd.f32 %v918, %v954
      %v977 = vadd.f32 %v921, %v954
      %v978 = vadd.f32 %v924, %v954
      %v979 = vadd.f32 %v927, %v954
      %v980 = vadd.f32 %v930, %v954
      %v981 = vadd.f32 %v933, %v954
      %v982 = vadd.f32 %v936, %v954
      %v983 = vadd.f32 %v939, %v954
      %v984 = vadd.f32 %v942, %v954
      %v985 = vadd.f32 %v945, %v954
      %v986 = vadd.f32 %v948, %v954
      %v987 = vadd.f32 %v951, %v954
      %v988 = vmax.f32 %v956, 0.0
      %v989 = vmax.f32 %v957, 0.0
      %v990 = vmax.f32 %v958, 0.0
      %v991 = vmax.f32 %v959, 0.0
      %v992 = vmax.f32 %v960, 0.0
      %v993 = vmax.f32 %v961, 0.0
      %v994 = vmax.f32 %v962, 0.0
      %v995 = vmax.f32 %v963, 0.0
      %v996 = vmax.f32 %v964, 0.0
      %v997 = vmax.f32 %v965, 0.0
      %v998 = vmax.f32 %v966, 0.0
      %v999 = vmax.f32 %v967, 0.0
      %v1000 = vmax.f32 %v968, 0.0
      %v1001 = vmax.f32 %v969, 0.0
      %v1002 = vmax.f32 %v970, 0.0
      %v1003 = vmax.f32 %v971, 0.0
      %v1004 = vmax.f32 %v972, 0.0
      %v1005 = vmax.f32 %v973, 0.0
      %v1006 = vmax.f32 %v974, 0.0
      %v1007 = vmax.f32 %v975, 0.0
      %v1008 = vmax.f32 %v976, 0.0
      %v1009 = vmax.f32 %v977, 0.0
      %v1010 = vmax.f32 %v978, 0.0
      %v1011 = vmax.f32 %v979, 0.0
      %v1012 = vmax.f32 %v980, 0.0
      %v1013 = vmax.f32 %v981, 0.0
      %v1014 = vmax.f32 %v982, 0.0
      %v1015 = vmax.f32 %v983, 0.0
      %v1016 = vmax.f32 %v984, 0.0
      %v1017 = vmax.f32 %v985, 0.0
      %v1018 = vmax.f32 %v986, 0.0
      %v1019 = vmax.f32 %v987, 0.0
      %vm1020 = vcmask 7168
      %1021 = vst.msk [vmem:[%s282] sm:$0xff] %vm1020, %v988
      %1022 = vst.msk [vmem:[%s282 + $0x8] sm:$0xff] %vm1020, %v989
      %1023 = vst.msk [vmem:[%s282 + $0x10] sm:$0xff] %vm1020, %v990
      %1024 = vst.msk [vmem:[%s282 + $0x18] sm:$0xff] %vm1020, %v991
      %1025 = vst.msk [vmem:[%s282 + $0x20] sm:$0xff] %vm1020, %v992
      %1026 = vst.msk [vmem:[%s282 + $0x28] sm:$0xff] %vm1020, %v993
      %1027 = vst.msk [vmem:[%s282 + $0x30] sm:$0xff] %vm1020, %v994
      %1028 = vst.msk [vmem:[%s282 + $0x38] sm:$0xff] %vm1020, %v995
      %1029 = vst.msk [vmem:[%s282 + $0x40] sm:$0xff] %vm1020, %v996
      %1030 = vst.msk [vmem:[%s282 + $0x48] sm:$0xff] %vm1020, %v997
      %1031 = vst.msk [vmem:[%s282 + $0x50] sm:$0xff] %vm1020, %v998
      %1032 = vst.msk [vmem:[%s282 + $0x58] sm:$0xff] %vm1020, %v999
      %1033 = vst.msk [vmem:[%s282 + $0x60] sm:$0xff] %vm1020, %v1000
      %1034 = vst.msk [vmem:[%s282 + $0x68] sm:$0xff] %vm1020, %v1001
      %1035 = vst.msk [vmem:[%s282 + $0x70] sm:$0xff] %vm1020, %v1002
      %1036 = vst.msk [vmem:[%s282 + $0x78] sm:$0xff] %vm1020, %v1003
      %1037 = vst.msk [vmem:[%s282 + $0x80] sm:$0xff] %vm1020, %v1004
      %1038 = vst.msk [vmem:[%s282 + $0x88] sm:$0xff] %vm1020, %v1005
      %1039 = vst.msk [vmem:[%s282 + $0x90] sm:$0xff] %vm1020, %v1006
      %1040 = vst.msk [vmem:[%s282 + $0x98] sm:$0xff] %vm1020, %v1007
      %1041 = vst.msk [vmem:[%s282 + $0xa0] sm:$0xff] %vm1020, %v1008
      %1042 = vst.msk [vmem:[%s282 + $0xa8] sm:$0xff] %vm1020, %v1009
      %1043 = vst.msk [vmem:[%s282 + $0xb0] sm:$0xff] %vm1020, %v1010
      %1044 = vst.msk [vmem:[%s282 + $0xb8] sm:$0xff] %vm1020, %v1011
      %1045 = vst.msk [vmem:[%s282 + $0xc0] sm:$0xff] %vm1020, %v1012
      %1046 = vst.msk [vmem:[%s282 + $0xc8] sm:$0xff] %vm1020, %v1013
      %1047 = vst.msk [vmem:[%s282 + $0xd0] sm:$0xff] %vm1020, %v1014
      %1048 = vst.msk [vmem:[%s282 + $0xd8] sm:$0xff] %vm1020, %v1015
      %1049 = vst.msk [vmem:[%s282 + $0xe0] sm:$0xff] %vm1020, %v1016
      %1050 = vst.msk [vmem:[%s282 + $0xe8] sm:$0xff] %vm1020, %v1017
      %1051 = vst.msk [vmem:[%s282 + $0xf0] sm:$0xff] %vm1020, %v1018
      %1052 = vst.msk [vmem:[%s282 + $0xf8] sm:$0xff] %vm1020, %v1019
      %s1053 = smul.u32 32, %s20
      %p1054 = scmp.lt.s32.totalorder %s1053, 63
      %s1055 = scalar_select %p1054, %s1053, 63
      %s1056 = smul.addr %s1055, 8
      %s1057 = scalar_lea.vmem %s7, %s1056
      // Predicated region
      $region49: #{custom_model_forward.1} parent=47 // pred_check
        %p1058 = pneg %p190
      $region50: #{custom_model_forward.1} parent=47 // pred_check_branch
        %1060 = sbr.rel (%p1058) target = $region52
      $region51: #{custom_model_forward.1} parent=47 // pred_region
        %s1061 = smul.u32 32, %s20
      $region52: #{custom_model_forward.1} parent=47 // pred_fallthru
        _
    $region48: #{custom_model_forward.1} parent=5 // pred_fallthru
      _
    %p1062 = scmp.le.s32.totalorder 2, %s15
    // Predicated region
    $region53: #{custom_model_forward.1} parent=5 // pred_check
      %p1063 = pneg %p1062
    $region54: #{custom_model_forward.1} parent=5 // pred_check_branch
      %1065 = sbr.rel (%p1063) target = $region56
    $region55: #{custom_model_forward.1} parent=5 // pred_region
      %s1066 = ssub.s32 %s15, 2
      // Predicated region
      $region57: #{custom_model_forward.1} parent=55 // pred_check
        %p1067 = pneg %p196
      $region58: #{custom_model_forward.1} parent=55 // pred_check_branch
        %1069 = sbr.rel (%p1067) target = $region60
      $region59: #{custom_model_forward.1} parent=55 // pred_region
        %s1070 = smul.u32 32, %s21
        %p1071 = scmp.lt.s32.totalorder %s1070, 63
        %s1072 = scalar_select %p1071, %s1070, 63
        %s1073 = smul.addr %s1072, 8
        %s1074 = scalar_lea.vmem %s7, %s1073
      $region60: #{custom_model_forward.1} parent=55 // pred_fallthru
        _
    $region56: #{custom_model_forward.1} parent=5 // pred_fallthru
      _
  $region6: #{custom_model_forward.1} parent=0 // loop_footer
    %s19 = sadd.s32 1, %s15
  $region7: #{custom_model_forward.1} parent=0 // loop_footer_branch
    %14 = sbr.rel target = $region3
  $region8: #{custom_model_forward.1} parent=0 // loop_exit
    _

</llo_original>
